<compile_context>
chip_gen: v7x
topology: tpu7x:2x2x1
jax: 0.10.0
libtpu: 0.0.40
codegen_flags: <defaults>
</compile_context>

<pallas_src>
import jax
import jax.numpy as jnp
from jax.experimental import pallas as pl
from jax.experimental.pallas import tpu as pltpu


def _round_up(x: int, m: int) -> int:
    return (x + m - 1) // m * m


def _elmo_regression_kernel(x1_ref, x2_ref, w_ref, b_ref, o_ref):
    # x1_ref: (TB, D1), x2_ref: (TB, D2) in native dtype
    # w_ref:  (D1+D2, 1) resident in VMEM, b_ref: (1, 1) f32 in SMEM
    # o_ref:  (TB, 1) f32
    x1 = x1_ref[...]
    x2 = x2_ref[...]
    d1 = x1.shape[1]
    # Static slices of the resident weight column (fuses the concat exactly).
    w1 = w_ref[:d1, :].astype(x1.dtype)
    w2 = w_ref[d1:, :].astype(x2.dtype)
    acc = jnp.dot(x1, w1, preferred_element_type=jnp.float32)
    acc = acc + jnp.dot(x2, w2, preferred_element_type=jnp.float32)
    o_ref[...] = (acc + b_ref[0, 0]).astype(o_ref.dtype)


def prepare_params(weight, bias, compute_dtype=jnp.float32):
    """One-time parameter prep (hoisted out of the per-call hot path).

    weight: (1, D1+D2) Linear weight, bias: (1,) Linear bias.
    Returns (w_col, b_smem) ready for elmo_regression_forward.
    """
    w_col = jnp.asarray(weight).reshape(1, -1).T.astype(compute_dtype)  # (D1+D2, 1)
    b_smem = jnp.asarray(bias).reshape(1, 1).astype(jnp.float32)        # (1, 1)
    return w_col, b_smem


def elmo_regression_forward(elmo_avg1, elmo_avg2, w_col, b_smem, *, block_b=None):
    """elmo_avg1: (B, D1), elmo_avg2: (B, D2), w_col: (D1+D2, 1), b_smem: (1, 1) -> (B,)."""
    B, d1 = elmo_avg1.shape
    B2, d2 = elmo_avg2.shape
    assert B2 == B, "batch mismatch"
    assert w_col.shape == (d1 + d2, 1)

    itemsize = elmo_avg1.dtype.itemsize
    if block_b is None:
        # ~512 f32 rows (or 1024 bf16 rows) x 2 inputs x 2 pipeline buffers stays
        # comfortably under v7x's 64 MiB VMEM at D1=D2=1024; v5e/v6e have headroom.
        block_b = 1024 if itemsize <= 2 else 512

    # Batch tile: multiple of 8 sublanes; pad B so the grid divides evenly.
    tb = _round_up(min(block_b, _round_up(B, 8)), 8)
    b_pad = _round_up(B, tb)
    if b_pad != B:
        pad = ((0, b_pad - B), (0, 0))
        elmo_avg1 = jnp.pad(elmo_avg1, pad)
        elmo_avg2 = jnp.pad(elmo_avg2, pad)
    num_tiles = b_pad // tb

    # Rough double-buffered VMEM footprint (+50% headroom), clamped to [32, 64] MiB
    # (>= default scoped limit on all gens, <= v7x physical VMEM).
    vmem_needed = 2 * (tb * (d1 + d2) * itemsize + tb * 4) + (d1 + d2) * w_col.dtype.itemsize
    vmem_limit = int(min(64 * 1024 * 1024, max(32 * 1024 * 1024, vmem_needed * 1.5)))

    out = pl.pallas_call(
        _elmo_regression_kernel,
        out_shape=jax.ShapeDtypeStruct((b_pad, 1), jnp.float32),
        grid=(num_tiles,),
        in_specs=[
            pl.BlockSpec((tb, d1), lambda i: (i, 0)),       # activation slab 1
            pl.BlockSpec((tb, d2), lambda i: (i, 0)),       # activation slab 2
            pl.BlockSpec((d1 + d2, 1), lambda i: (0, 0)),   # weight column, resident
            pl.BlockSpec(memory_space=pltpu.SMEM),          # bias scalar
        ],
        out_specs=pl.BlockSpec((tb, 1), lambda i: (i, 0)),
        compiler_params=pltpu.CompilerParams(
            dimension_semantics=("parallel",),               # shard batch tiles across TCs
            vmem_limit_bytes=vmem_limit,
        ),
        cost_estimate=pl.CostEstimate(
            flops=int(2 * b_pad * (d1 + d2)),
            transcendentals=0,
            bytes_accessed=int(
                b_pad * (d1 + d2) * itemsize
                + (d1 + d2) * w_col.dtype.itemsize
                + b_pad * 4
            ),
        ),
    )(elmo_avg1, elmo_avg2, w_col, b_smem)

    # Linear(...).squeeze(): drop the trailing singleton and any batch padding.
    return out[:B, 0]


def _init_params(key, input_dim):
    # Deterministic init mirroring torch.nn.Linear default (uniform +-1/sqrt(fan_in)).
    kw, kb = jax.random.split(key)
    bound = 1.0 / jnp.sqrt(jnp.float32(input_dim))
    weight = jax.random.uniform(kw, (1, input_dim), jnp.float32, -bound, bound)
    bias = jax.random.uniform(kb, (1,), jnp.float32, -bound, bound)
    return weight, bias


if __name__ == "__main__":
    key = jax.random.PRNGKey(0)
    k1, k2, kp = jax.random.split(key, 3)

    B = 8          # batch
    D_HALF = 64    # each ELMo average embedding dim (small stand-in for 1024)
    INPUT_DIM = 2 * D_HALF

    elmo_avg1 = jax.random.normal(k1, (B, D_HALF), jnp.float32)
    elmo_avg2 = jax.random.normal(k2, (B, D_HALF), jnp.float32)
    weight, bias = _init_params(kp, INPUT_DIM)

    # One-time weight prep (transpose + cast), hoisted out of the hot path.
    w_col, b_smem = prepare_params(weight, bias, compute_dtype=elmo_avg1.dtype)

    fwd = jax.jit(elmo_regression_forward)
    out = jax.block_until_ready(fwd(elmo_avg1, elmo_avg2, w_col, b_smem))

    # Reference check in plain JAX (same math as the PyTorch forward, eval mode).
    combined = jnp.concatenate([elmo_avg1, elmo_avg2], axis=1)
    ref = (combined @ weight.T + bias).squeeze()
    assert out.shape == (B,), out.shape
    assert jnp.allclose(out, ref, atol=1e-5, rtol=1e-5)

    # Exercise the ragged-batch (tail padding) path at a second shape.
    B2 = 13
    x1b = jax.random.normal(jax.random.PRNGKey(1), (B2, D_HALF), jnp.float32)
    x2b = jax.random.normal(jax.random.PRNGKey(2), (B2, D_HALF), jnp.float32)
    out2 = jax.block_until_ready(fwd(x1b, x2b, w_col, b_smem))
    ref2 = (jnp.concatenate([x1b, x2b], axis=1) @ weight.T + bias).squeeze()
    assert out2.shape == (B2,)
    assert jnp.allclose(out2, ref2, atol=1e-5, rtol=1e-5)

    print("KERNEL_OK")
</pallas_src>

<mosaic_0001>
module attributes {stable_mosaic.version = 11 : i64} {
  func.func @_elmo_regression_kernel(%arg0: i32, %arg1: memref<8x64xf32, #tpu.memory_space<vmem>>, %arg2: memref<8x64xf32, #tpu.memory_space<vmem>>, %arg3: memref<128x1xf32, #tpu.memory_space<vmem>>, %arg4: memref<1x1xf32, #tpu.memory_space<smem>>, %arg5: memref<8x1xf32, #tpu.memory_space<vmem>>) attributes {dimension_semantics = [#tpu.dimension_semantics<parallel>], iteration_bounds = array<i64: 1>, scalar_prefetch = 0 : i64, scratch_operands = 0 : i64, tpu.core_type = #tpu.core_type<tc>, window_params = [{transform_indices = @transform_0, window_bounds = array<i64: 8, 64>}, {transform_indices = @transform_1, window_bounds = array<i64: 8, 64>}, {pipeline_mode = #tpu.pipeline_mode<synchronous>, transform_indices = @transform_2, window_bounds = array<i64: 128, 1>}, {transform_indices = @transform_3, window_bounds = array<i64: 1, 1>}, {transform_indices = @transform_4, window_bounds = array<i64: 8, 1>}]} {
    %c0 = arith.constant 0 : index
    %c0_0 = arith.constant 0 : index
    %0 = vector.load %arg1[%c0, %c0_0] : memref<8x64xf32, #tpu.memory_space<vmem>>, vector<8x64xf32>
    %c0_1 = arith.constant 0 : index
    %c0_2 = arith.constant 0 : index
    %1 = vector.load %arg2[%c0_1, %c0_2] : memref<8x64xf32, #tpu.memory_space<vmem>>, vector<8x64xf32>
    %c0_3 = arith.constant 0 : index
    %c0_4 = arith.constant 0 : index
    %2 = vector.load %arg3[%c0_3, %c0_4] : memref<128x1xf32, #tpu.memory_space<vmem>>, vector<64x1xf32>
    %c64 = arith.constant 64 : index
    %c0_5 = arith.constant 0 : index
    %3 = vector.load %arg3[%c64, %c0_5] : memref<128x1xf32, #tpu.memory_space<vmem>>, vector<64x1xf32>
    %cst = arith.constant dense<0.000000e+00> : vector<8x1xf32>
    %4 = tpu.matmul %0, %2, %cst {dimension_numbers = #tpu.dot_dimension_numbers<[1], [0], [0], [1], [0, 0, 1, 1], [], []>} : vector<8x64xf32>, vector<64x1xf32>, vector<8x1xf32> -> vector<8x1xf32>
    %cst_6 = arith.constant dense<0.000000e+00> : vector<8x1xf32>
    %5 = tpu.matmul %1, %3, %cst_6 {dimension_numbers = #tpu.dot_dimension_numbers<[1], [0], [0], [1], [0, 0, 1, 1], [], []>} : vector<8x64xf32>, vector<64x1xf32>, vector<8x1xf32> -> vector<8x1xf32>
    %6 = arith.addf %4, %5 : vector<8x1xf32>
    %c0_7 = arith.constant 0 : index
    %c0_8 = arith.constant 0 : index
    %7 = memref.load %arg4[%c0_7, %c0_8] : memref<1x1xf32, #tpu.memory_space<smem>>
    %8 = vector.broadcast %7 : f32 to vector<8x1xf32>
    %9 = arith.addf %6, %8 : vector<8x1xf32>
    %c0_9 = arith.constant 0 : index
    %c0_10 = arith.constant 0 : index
    %10 = vector.load %arg5[%c0_9, %c0_10] : memref<8x1xf32, #tpu.memory_space<vmem>>, vector<8x1xf32>
    tpu.vector_store %arg5[%c0_9, %c0_10], %9 {strides = array<i32>} : memref<8x1xf32, #tpu.memory_space<vmem>>, vector<8x1xf32>,
    return
  }
  func.func @transform_0(%arg0: i32) -> (i32, i32) {
    %c0_i32 = arith.constant 0 : i32
    %c0_i32_0 = arith.constant 0 : i32
    return %arg0, %c0_i32 : i32, i32
  }
  func.func @transform_1(%arg0: i32) -> (i32, i32) {
    %c0_i32 = arith.constant 0 : i32
    %c0_i32_0 = arith.constant 0 : i32
    return %arg0, %c0_i32 : i32, i32
  }
  func.func @transform_2(%arg0: i32) -> (i32, i32) {
    %c0_i32 = arith.constant 0 : i32
    %c0_i32_0 = arith.constant 0 : i32
    %c0_i32_1 = arith.constant 0 : i32
    return %c0_i32, %c0_i32_0 : i32, i32
  }
  func.func @transform_3(%arg0: i32) -> (i32, i32) {
    %c0_i32 = arith.constant 0 : i32
    %c0_i32_0 = arith.constant 0 : i32
    %c0_i32_1 = arith.constant 0 : i32
    return %c0_i32, %c0_i32_0 : i32, i32
  }
  func.func @transform_4(%arg0: i32) -> (i32, i32) {
    %c0_i32 = arith.constant 0 : i32
    %c0_i32_0 = arith.constant 0 : i32
    return %arg0, %c0_i32 : i32, i32
  }
}

</mosaic_0001>

<llo_original>
// kernel: elmo_regression_forward.1
$region0: #{elmo_regression_forward.1}
  #allocation0 [shape = 'u32[]', space=smem, size = 0x4, offset = 0x4, fixed_abs, tag = 'smem constant byte address 0x4 - core index']
  #allocation1 [shape = 'u32[144,128]{1,0:T(1,128)}', space=vmem, size = 0x12000, scoped, tag = 'internal scratch']
  #allocation2 [shape = 'f32[1,1]{1,0:T(1,128)S(6)}', space=smem, size = 0x200, scoped, tag = 'scoped memory for elmo_regression_forward.1']
  %s0 = inlined_call_operand.vmem [shape: f32[8,64], index: 0, kind: input, shape index: {}]
  %s1 = inlined_call_operand.vmem [shape: f32[8,64], index: 1, kind: input, shape index: {}]
  %s2 = inlined_call_operand.vmem [shape: f32[128,1], index: 2, kind: input, shape index: {}]
  %s3 = inlined_call_operand.<no memory space> [shape: f32[1,1], index: 3, kind: input, shape index: {}]
  %s4 = inlined_call_operand.vmem [shape: f32[8,1], index: 4, kind: output, shape index: {}]
  %s5 = sld [smem:[#allocation0]]
  $region26: #{elmo_regression_forward.1} parent=0
    _
  %s7 = ssub.s32 1, %s5
  %s8 = scalar_select 0, %s7, %s5
  %9 = sst [smem:[#allocation2]] %s3
  // Predicated region
  $region2: #{elmo_regression_forward.1} parent=0 // pred_check
    _
  $region3: #{elmo_regression_forward.1} parent=0 // pred_check_branch
    %11 = sbr.rel (0) target = $region5
  $region4: #{elmo_regression_forward.1} parent=0 // pred_region
    _
  $region5: #{elmo_regression_forward.1} parent=0 // pred_fallthru
    _
  // Predicated region
  $region6: #{elmo_regression_forward.1} parent=0 // pred_check
    _
  $region7: #{elmo_regression_forward.1} parent=0 // pred_check_branch
    %13 = sbr.rel (0) target = $region9
  $region8: #{elmo_regression_forward.1} parent=0 // pred_region
    _
  $region9: #{elmo_regression_forward.1} parent=0 // pred_fallthru
    _
  // Predicated region
  $region10: #{elmo_regression_forward.1} parent=0 // pred_check
    _
  $region11: #{elmo_regression_forward.1} parent=0 // pred_check_branch
    %15 = sbr.rel (0) target = $region13
  $region12: #{elmo_regression_forward.1} parent=0 // pred_region
    _
  $region13: #{elmo_regression_forward.1} parent=0 // pred_fallthru
    _
  // Predicated region
  $region14: #{elmo_regression_forward.1} parent=0 // pred_check
    _
  $region15: #{elmo_regression_forward.1} parent=0 // pred_check_branch
    %17 = sbr.rel (0) target = $region17
  $region16: #{elmo_regression_forward.1} parent=0 // pred_region
    _
  $region17: #{elmo_regression_forward.1} parent=0 // pred_fallthru
    _
  %v18 = vld [vmem:[%s0] sm:$0xff]
  %v19 = vld [vmem:[%s1] sm:$0xff]
  %v20 = vld [vmem:[%s2] sm:$0xff]
  %v21 = vld [vmem:[%s2 + $0x8] sm:$0xff]
  %v22 = vld [vmem:[%s2 + $0x10] sm:$0xff]
  %v23 = vld [vmem:[%s2 + $0x18] sm:$0xff]
  %v24 = vld [vmem:[%s2 + $0x20] sm:$0xff]
  %v25 = vld [vmem:[%s2 + $0x28] sm:$0xff]
  %v26 = vld [vmem:[%s2 + $0x30] sm:$0xff]
  %v27 = vld [vmem:[%s2 + $0x38] sm:$0xff]
  %v28 = vld [vmem:[%s2 + $0x40] sm:$0xff]
  %v29 = vld [vmem:[%s2 + $0x48] sm:$0xff]
  %v30 = vld [vmem:[%s2 + $0x50] sm:$0xff]
  %v31 = vld [vmem:[%s2 + $0x58] sm:$0xff]
  %v32 = vld [vmem:[%s2 + $0x60] sm:$0xff]
  %v33 = vld [vmem:[%s2 + $0x68] sm:$0xff]
  %v34 = vld [vmem:[%s2 + $0x70] sm:$0xff]
  %v35 = vld [vmem:[%s2 + $0x78] sm:$0xff]
  %vm36 = vcmask 523264
  %v38 = vsel %vm36, %v19, 0
  %40 = vmatprep.subr.mxu0 0.0
  %41 = vmatpush1.msra.mxu0 %v28
  %42 = vmatprep.subr.mxu0 0.0
  %43 = vmatpush1.msra.mxu0 %v29
  %44 = vmatprep.subr.mxu0 0.0
  %45 = vmatpush1.msra.mxu0 %v30
  %46 = vmatprep.subr.mxu0 0.0
  %47 = vmatpush1.msra.mxu0 %v31
  %48 = vmatprep.subr.mxu0 0.0
  %49 = vmatpush1.msra.mxu0 %v32
  %50 = vmatprep.subr.mxu0 0.0
  %51 = vmatpush1.msra.mxu0 %v33
  %52 = vmatprep.subr.mxu0 0.0
  %53 = vmatpush1.msra.mxu0 %v34
  %54 = vmatprep.subr.mxu0 0.0
  %55 = vmatpush1.msra.mxu0 %v35
  %56 = vmatprep.subr.mxu0 0.0
  %57 = vmatpush1.msra.mxu0 0.0
  %58 = vmatprep.subr.mxu0 0.0
  %59 = vmatpush1.msra.mxu0 0.0
  %60 = vmatprep.subr.mxu0 0.0
  %61 = vmatpush1.msra.mxu0 0.0
  %62 = vmatprep.subr.mxu0 0.0
  %63 = vmatpush1.msra.mxu0 0.0
  %64 = vmatprep.subr.mxu0 0.0
  %65 = vmatpush1.msra.mxu0 0.0
  %66 = vmatprep.subr.mxu0 0.0
  %67 = vmatpush1.msra.mxu0 0.0
  %68 = vmatprep.subr.mxu0 0.0
  %69 = vmatpush1.msra.mxu0 0.0
  %70 = vmatprep.subr.mxu0 0.0
  %71 = vmatpush1.msra.mxu0 0.0
  %72 = vmatprep.subr.mxu0 0.0
  %73 = vmatpush1.msra.mxu0 0.0
  %74 = vmatprep.subr.mxu0 0.0
  %75 = vmatpush1.msra.mxu0 0.0
  %76 = vmatprep.subr.mxu0 0.0
  %77 = vmatpush1.msra.mxu0 0.0
  %78 = vmatprep.subr.mxu0 0.0
  %79 = vmatpush1.msra.mxu0 0.0
  %80 = vmatprep.subr.mxu0 0.0
  %81 = vmatpush1.msra.mxu0 0.0
  %82 = vmatprep.subr.mxu0 0.0
  %83 = vmatpush1.msra.mxu0 0.0
  %84 = vmatprep.subr.mxu0 0.0
  %85 = vmatpush1.msra.mxu0 0.0
  %86 = vmatprep.subr.mxu0 0.0
  %87 = vmatpush1.msra.mxu0 0.0
  %88 = vmatprep.subr.mxu0 0.0
  %89 = vmatpush1.msra.mxu0 0.0
  %90 = vmatprep.subr.mxu0 0.0
  %91 = vmatpush1.msra.mxu0 0.0
  %92 = vmatprep.subr.mxu0 0.0
  %93 = vmatpush1.msra.mxu0 0.0
  %94 = vmatprep.subr.mxu0 0.0
  %95 = vmatpush1.msra.mxu0 0.0
  %96 = vmatprep.subr.mxu0 0.0
  %97 = vmatpush1.msra.mxu0 0.0
  %98 = vmatprep.subr.mxu0 0.0
  %99 = vmatpush1.msra.mxu0 0.0
  %100 = vmatprep.subr.mxu0 0.0
  %101 = vmatpush1.msra.mxu0 0.0
  %102 = vmatprep.subr.mxu0 0.0
  %103 = vmatpush1.msra.mxu0 0.0
  %104 = vmatprep.mubr.f32.mxu0 0.0
  %105 = vmatmul.mubr.f32.gmra.mrb[0].mxu0 %v38
  %v106 = vpop.f32.mrb[0].mxu0
  %v107 = vadd.f32 0.0, %v106
  %v108 = vpop.f32.mrb[0].mxu0
  %109 = vdwg.mxu0
  %v111 = vsel %vm36, %v18, 0
  %113 = vmatprep.subr.mxu0 0.0
  %114 = vmatpush1.msra.mxu0 %v20
  %115 = vmatprep.subr.mxu0 0.0
  %116 = vmatpush1.msra.mxu0 %v21
  %117 = vmatprep.subr.mxu0 0.0
  %118 = vmatpush1.msra.mxu0 %v22
  %119 = vmatprep.subr.mxu0 0.0
  %120 = vmatpush1.msra.mxu0 %v23
  %121 = vmatprep.subr.mxu0 0.0
  %122 = vmatpush1.msra.mxu0 %v24
  %123 = vmatprep.subr.mxu0 0.0
  %124 = vmatpush1.msra.mxu0 %v25
  %125 = vmatprep.subr.mxu0 0.0
  %126 = vmatpush1.msra.mxu0 %v26
  %127 = vmatprep.subr.mxu0 0.0
  %128 = vmatpush1.msra.mxu0 %v27
  %129 = vmatprep.subr.mxu0 0.0
  %130 = vmatpush1.msra.mxu0 0.0
  %131 = vmatprep.subr.mxu0 0.0
  %132 = vmatpush1.msra.mxu0 0.0
  %133 = vmatprep.subr.mxu0 0.0
  %134 = vmatpush1.msra.mxu0 0.0
  %135 = vmatprep.subr.mxu0 0.0
  %136 = vmatpush1.msra.mxu0 0.0
  %137 = vmatprep.subr.mxu0 0.0
  %138 = vmatpush1.msra.mxu0 0.0
  %139 = vmatprep.subr.mxu0 0.0
  %140 = vmatpush1.msra.mxu0 0.0
  %141 = vmatprep.subr.mxu0 0.0
  %142 = vmatpush1.msra.mxu0 0.0
  %143 = vmatprep.subr.mxu0 0.0
  %144 = vmatpush1.msra.mxu0 0.0
  %145 = vmatprep.subr.mxu0 0.0
  %146 = vmatpush1.msra.mxu0 0.0
  %147 = vmatprep.subr.mxu0 0.0
  %148 = vmatpush1.msra.mxu0 0.0
  %149 = vmatprep.subr.mxu0 0.0
  %150 = vmatpush1.msra.mxu0 0.0
  %151 = vmatprep.subr.mxu0 0.0
  %152 = vmatpush1.msra.mxu0 0.0
  %153 = vmatprep.subr.mxu0 0.0
  %154 = vmatpush1.msra.mxu0 0.0
  %155 = vmatprep.subr.mxu0 0.0
  %156 = vmatpush1.msra.mxu0 0.0
  %157 = vmatprep.subr.mxu0 0.0
  %158 = vmatpush1.msra.mxu0 0.0
  %159 = vmatprep.subr.mxu0 0.0
  %160 = vmatpush1.msra.mxu0 0.0
  %161 = vmatprep.subr.mxu0 0.0
  %162 = vmatpush1.msra.mxu0 0.0
  %163 = vmatprep.subr.mxu0 0.0
  %164 = vmatpush1.msra.mxu0 0.0
  %165 = vmatprep.subr.mxu0 0.0
  %166 = vmatpush1.msra.mxu0 0.0
  %167 = vmatprep.subr.mxu0 0.0
  %168 = vmatpush1.msra.mxu0 0.0
  %169 = vmatprep.subr.mxu0 0.0
  %170 = vmatpush1.msra.mxu0 0.0
  %171 = vmatprep.subr.mxu0 0.0
  %172 = vmatpush1.msra.mxu0 0.0
  %173 = vmatprep.subr.mxu0 0.0
  %174 = vmatpush1.msra.mxu0 0.0
  %175 = vmatprep.subr.mxu0 0.0
  %176 = vmatpush1.msra.mxu0 0.0
  %177 = vmatprep.mubr.f32.mxu0 0.0
  %178 = vmatmul.mubr.f32.gmra.mrb[0].mxu0 %v111
  %v179 = vpop.f32.mrb[0].mxu0
  %v180 = vadd.f32 %v107, %v179
  %v181 = vpop.f32.mrb[0].mxu0
  %182 = vdwg.mxu0
  %s183 = sld [smem:[#allocation2]]
  %v184 = vstv %s183
  %v185 = vadd.f32 %v180, %v184
  %vm186 = vcmask 7168
  %187 = vst.msk [vmem:[%s4] sm:$0xff] %vm186, %v185
  // Predicated region
  $region18: #{elmo_regression_forward.1} parent=0 // pred_check
    _
  $region19: #{elmo_regression_forward.1} parent=0 // pred_check_branch
    %189 = sbr.rel (0) target = $region21
  $region20: #{elmo_regression_forward.1} parent=0 // pred_region
    _
  $region21: #{elmo_regression_forward.1} parent=0 // pred_fallthru
    _
  // Predicated region
  $region22: #{elmo_regression_forward.1} parent=0 // pred_check
    _
  $region23: #{elmo_regression_forward.1} parent=0 // pred_check_branch
    %191 = sbr.rel (0) target = $region25
  $region24: #{elmo_regression_forward.1} parent=0 // pred_region
    _
  $region25: #{elmo_regression_forward.1} parent=0 // pred_fallthru
    _

</llo_original>
